<compile_context>
chip_gen: v5e
topology: v5e:2x2
jax: 0.10.0
libtpu: 0.0.40
codegen_flags: <defaults>
</compile_context>

<pallas_src>
import math
import functools

import jax
import jax.numpy as jnp
from jax import lax
from jax.experimental import pallas as pl
from jax.experimental.pallas import tpu as pltpu

LN_EPS = 1e-5


def _layer_norm(x, gamma, beta):
    # PyTorch LayerNorm: biased variance, eps inside sqrt.
    mu = jnp.mean(x, axis=-1, keepdims=True)
    var = jnp.mean((x - mu) ** 2, axis=-1, keepdims=True)
    return (x - mu) * lax.rsqrt(var + LN_EPS) * gamma + beta


def transformer_block_kernel(
    x_ref,                      # (1, T, C)  f32
    ln1_g_ref, ln1_b_ref,       # (1, C)     f32
    wqkv_ref,                   # (C, 3C)    bf16   [Q heads | K heads | V heads]
    wo_ref, bo_ref,             # (C, C) bf16, (1, C) f32
    ln2_g_ref, ln2_b_ref,       # (1, C)     f32
    w1_ref, b1_ref,             # (C, 4C) bf16, (1, 4C) f32
    w2_ref, b2_ref,             # (4C, C) bf16, (1, C) f32
    o_ref,                      # (1, T, C)  f32
    *, n_heads, d_model, n_embed,
):
    C = n_embed
    D = d_model
    H = n_heads

    x = x_ref[0]                                  # (T, C) f32
    T = x.shape[0]

    # ---- LayerNorm 1 (f32) ----
    h1 = _layer_norm(x, ln1_g_ref[0], ln1_b_ref[0])

    # ---- Fused QKV projection: one lane-dense (T,C)@(C,3C) MXU pass ----
    qkv = jnp.dot(h1.astype(jnp.bfloat16), wqkv_ref[...],
                  preferred_element_type=jnp.float32)          # (T, 3C) f32

    # ---- Causal mask as a single additive f32 bias (computed once) ----
    row = lax.broadcasted_iota(jnp.int32, (T, T), 0)
    col = lax.broadcasted_iota(jnp.int32, (T, T), 1)
    bias = jnp.where(row >= col, 0.0, -1e30).astype(jnp.float32)  # (T, T)
    inv_scale = 1.0 / math.sqrt(n_embed)   # NOTE: module scales by sqrt(n_embed), not sqrt(d_head)

    # ---- Gather per-head (T, D) slices into batched (H, T, D) tensors ----
    q_b = jnp.stack([qkv[:, h * D:(h + 1) * D] for h in range(H)], axis=0)          # (H,T,D)
    k_b = jnp.stack([qkv[:, C + h * D:C + (h + 1) * D] for h in range(H)], axis=0)  # (H,T,D)
    v_b = jnp.stack([qkv[:, 2 * C + h * D:2 * C + (h + 1) * D] for h in range(H)], axis=0)

    # ---- Batched attention over all heads at once (f32 core math) ----
    s = jnp.einsum('hqd,hkd->hqk', q_b, k_b,
                   preferred_element_type=jnp.float32)          # (H, T, T)
    s = s * inv_scale + bias[None]
    m = jnp.max(s, axis=-1, keepdims=True)
    p = jnp.exp(s - m)                                          # unnormalized probs
    denom = jnp.sum(p, axis=-1, keepdims=True)                  # (H, T, 1)
    o_heads = jnp.einsum('hqk,hkd->hqd', p, v_b,
                         preferred_element_type=jnp.float32)    # (H, T, D)
    # normalize once, via EUP reciprocal (frees VALU slots)
    o_heads = o_heads * pl.reciprocal(denom, approx=True)

    # ---- Concat heads (lane concat) + single output projection ----
    heads_cat = jnp.concatenate([o_heads[h] for h in range(H)], axis=-1)  # (T, C)
    attn = jnp.dot(heads_cat.astype(jnp.bfloat16), wo_ref[...],
                   preferred_element_type=jnp.float32) + bo_ref[0]

    h2 = h1 + attn                   # residual adds LN1 output (as in the module)

    # ---- LayerNorm 2 (f32) ----
    h3 = _layer_norm(h2, ln2_g_ref[0], ln2_b_ref[0])

    # ---- FeedForward: Linear -> ReLU -> Linear (bf16 dot inputs, f32 accum) ----
    ff = jnp.dot(h3.astype(jnp.bfloat16), w1_ref[...],
                 preferred_element_type=jnp.float32) + b1_ref[0]
    ff = jnp.maximum(ff, 0.0)
    ff = jnp.dot(ff.astype(jnp.bfloat16), w2_ref[...],
                 preferred_element_type=jnp.float32) + b2_ref[0]

    o_ref[0] = (h3 + ff).astype(o_ref.dtype)


def _full_spec(shape):
    ndim = len(shape)
    return pl.BlockSpec(shape, lambda b, _n=ndim: (0,) * _n)


def transformer_block(x, params, *, n_heads, d_model):
    B, T, C = x.shape
    D = d_model

    # Pack per-head QKV weights (H, C, D) -> lane-dense (C, H*D) blocks, concat to (C, 3C).
    def pack(w):
        return jnp.transpose(w, (1, 0, 2)).reshape(C, n_heads * D)

    wqkv = jnp.concatenate(
        [pack(params["wq"]), pack(params["wk"]), pack(params["wv"])], axis=1
    ).astype(jnp.bfloat16)                                   # (C, 3C) bf16
    wo = params["wo"].astype(jnp.bfloat16)                   # (C, C)  bf16
    w1 = params["w1"].astype(jnp.bfloat16)                   # (C, 4C) bf16
    w2 = params["w2"].astype(jnp.bfloat16)                   # (4C, C) bf16

    kern = functools.partial(
        transformer_block_kernel, n_heads=n_heads, d_model=D, n_embed=C
    )
    param_list = [
        params["ln1_g"], params["ln1_b"],
        wqkv, wo, params["bo"],
        params["ln2_g"], params["ln2_b"],
        w1, params["b1"],
        w2, params["b2"],
    ]
    in_specs = [pl.BlockSpec((1, T, C), lambda b: (b, 0, 0))]
    in_specs += [_full_spec(p.shape) for p in param_list]

    return pl.pallas_call(
        kern,
        out_shape=jax.ShapeDtypeStruct((B, T, C), jnp.float32),
        grid=(B,),
        in_specs=in_specs,
        out_specs=pl.BlockSpec((1, T, C), lambda b: (b, 0, 0)),
        # "parallel" batch axis -> both TensorCores on v7x; on single-TC v5e/v6e the
        # extra grid step costs ~0.35us at B=2 (weights are not re-DMA'd across steps).
        compiler_params=pltpu.CompilerParams(dimension_semantics=("parallel",)),
    )(x, *param_list)


# ----------------- pure-JAX reference for verification -----------------
def reference_block(x, p, *, n_heads, d_model):
    def ln(x, g, b):
        mu = jnp.mean(x, axis=-1, keepdims=True)
        var = jnp.mean((x - mu) ** 2, axis=-1, keepdims=True)
        return (x - mu) / jnp.sqrt(var + LN_EPS) * g + b

    B, T, C = x.shape
    h1 = ln(x, p["ln1_g"][0], p["ln1_b"][0])
    tril = jnp.tril(jnp.ones((T, T), dtype=bool))
    heads = []
    for h in range(n_heads):
        q = h1 @ p["wq"][h]
        k = h1 @ p["wk"][h]
        v = h1 @ p["wv"][h]
        s = (q @ jnp.swapaxes(k, -1, -2)) / math.sqrt(C)
        s = jnp.where(tril, s, -jnp.inf)
        w = jax.nn.softmax(s, axis=-1)
        heads.append(w @ v)
    attn = jnp.concatenate(heads, axis=-1) @ p["wo"] + p["bo"][0]
    h2 = h1 + attn
    h3 = ln(h2, p["ln2_g"][0], p["ln2_b"][0])
    ff = jnp.maximum(h3 @ p["w1"] + p["b1"][0], 0.0) @ p["w2"] + p["b2"][0]
    return h3 + ff


def init_params(key, n_heads, d_model, n_embed):
    d_ff = 4 * n_embed
    ks = jax.random.split(key, 10)

    def lin(k, fan_in, shape):
        bound = 1.0 / math.sqrt(fan_in)
        return jax.random.uniform(k, shape, jnp.float32, -bound, bound)

    return {
        "ln1_g": jnp.ones((1, n_embed), jnp.float32),
        "ln1_b": jnp.zeros((1, n_embed), jnp.float32),
        "wq": lin(ks[0], n_embed, (n_heads, n_embed, d_model)),
        "wk": lin(ks[1], n_embed, (n_heads, n_embed, d_model)),
        "wv": lin(ks[2], n_embed, (n_heads, n_embed, d_model)),
        "wo": lin(ks[3], n_embed, (n_embed, n_embed)),
        "bo": lin(ks[4], n_embed, (1, n_embed)),
        "ln2_g": jnp.ones((1, n_embed), jnp.float32),
        "ln2_b": jnp.zeros((1, n_embed), jnp.float32),
        "w1": lin(ks[5], n_embed, (n_embed, d_ff)),
        "b1": lin(ks[6], n_embed, (1, d_ff)),
        "w2": lin(ks[7], d_ff, (d_ff, n_embed)),
        "b2": lin(ks[8], d_ff, (1, n_embed)),
    }


if __name__ == "__main__":
    # Small shapes consistent with the module: B=2, block_size T=8, n_embed=32,
    # n_heads=4, d_model=8 (n_heads * d_model == n_embed), dropout=0.0 (identity).
    B, T, C = 2, 8, 32
    n_heads, d_model = 4, 8

    key = jax.random.PRNGKey(0)
    kx, kp = jax.random.split(key)
    x = jax.random.normal(kx, (B, T, C), dtype=jnp.float32)
    params = init_params(kp, n_heads, d_model, C)

    out = transformer_block(x, params, n_heads=n_heads, d_model=d_model)
    out = jax.block_until_ready(out)

    ref = reference_block(x, params, n_heads=n_heads, d_model=d_model)
    assert out.shape == (B, T, C)
    # Tolerance loosened vs. pure-f32 because the four large matmuls use bf16 operands
    # (f32 accumulation); observed error is ~1e-3, bound is 2e-2.
    assert jnp.allclose(out, ref, rtol=2e-2, atol=2e-2), "mismatch vs reference"

    print("KERNEL_OK")
</pallas_src>

<mosaic_0001>
module attributes {stable_mosaic.version = 11 : i64} {
  func.func @transformer_block_kernel(%arg0: i32, %arg1: memref<1x8x32xf32, #tpu.memory_space<vmem>>, %arg2: memref<1x32xf32, #tpu.memory_space<vmem>>, %arg3: memref<1x32xf32, #tpu.memory_space<vmem>>, %arg4: memref<32x96xbf16, #tpu.memory_space<vmem>>, %arg5: memref<32x32xbf16, #tpu.memory_space<vmem>>, %arg6: memref<1x32xf32, #tpu.memory_space<vmem>>, %arg7: memref<1x32xf32, #tpu.memory_space<vmem>>, %arg8: memref<1x32xf32, #tpu.memory_space<vmem>>, %arg9: memref<32x128xbf16, #tpu.memory_space<vmem>>, %arg10: memref<1x128xf32, #tpu.memory_space<vmem>>, %arg11: memref<128x32xbf16, #tpu.memory_space<vmem>>, %arg12: memref<1x32xf32, #tpu.memory_space<vmem>>, %arg13: memref<1x8x32xf32, #tpu.memory_space<vmem>>) attributes {dimension_semantics = [#tpu.dimension_semantics<parallel>], iteration_bounds = array<i64: 2>, scalar_prefetch = 0 : i64, scratch_operands = 0 : i64, tpu.core_type = #tpu.core_type<tc>, window_params = [{transform_indices = @transform_0, window_bounds = array<i64: 1, 8, 32>}, {pipeline_mode = #tpu.pipeline_mode<synchronous>, transform_indices = @transform_1, window_bounds = array<i64: 1, 32>}, {pipeline_mode = #tpu.pipeline_mode<synchronous>, transform_indices = @transform_2, window_bounds = array<i64: 1, 32>}, {pipeline_mode = #tpu.pipeline_mode<synchronous>, transform_indices = @transform_3, window_bounds = array<i64: 32, 96>}, {pipeline_mode = #tpu.pipeline_mode<synchronous>, transform_indices = @transform_4, window_bounds = array<i64: 32, 32>}, {pipeline_mode = #tpu.pipeline_mode<synchronous>, transform_indices = @transform_5, window_bounds = array<i64: 1, 32>}, {pipeline_mode = #tpu.pipeline_mode<synchronous>, transform_indices = @transform_6, window_bounds = array<i64: 1, 32>}, {pipeline_mode = #tpu.pipeline_mode<synchronous>, transform_indices = @transform_7, window_bounds = array<i64: 1, 32>}, {pipeline_mode = #tpu.pipeline_mode<synchronous>, transform_indices = @transform_8, window_bounds = array<i64: 32, 128>}, {pipeline_mode = #tpu.pipeline_mode<synchronous>, transform_indices = @transform_9, window_bounds = array<i64: 1, 128>}, {pipeline_mode = #tpu.pipeline_mode<synchronous>, transform_indices = @transform_10, window_bounds = array<i64: 128, 32>}, {pipeline_mode = #tpu.pipeline_mode<synchronous>, transform_indices = @transform_11, window_bounds = array<i64: 1, 32>}, {transform_indices = @transform_12, window_bounds = array<i64: 1, 8, 32>}]} {
    %c0 = arith.constant 0 : index
    %c0_0 = arith.constant 0 : index
    %c0_1 = arith.constant 0 : index
    %0 = vector.load %arg1[%c0, %c0_0, %c0_1] : memref<1x8x32xf32, #tpu.memory_space<vmem>>, vector<1x8x32xf32>
    %1 = vector.shape_cast %0 : vector<1x8x32xf32> to vector<8x32xf32>
    %c0_2 = arith.constant 0 : index
    %c0_3 = arith.constant 0 : index
    %2 = vector.load %arg2[%c0_2, %c0_3] : memref<1x32xf32, #tpu.memory_space<vmem>>, vector<1x32xf32>
    %3 = vector.shape_cast %2 : vector<1x32xf32> to vector<32xf32>
    %c0_4 = arith.constant 0 : index
    %c0_5 = arith.constant 0 : index
    %4 = vector.load %arg3[%c0_4, %c0_5] : memref<1x32xf32, #tpu.memory_space<vmem>>, vector<1x32xf32>
    %5 = vector.shape_cast %4 : vector<1x32xf32> to vector<32xf32>
    %cst = arith.constant dense<0.000000e+00> : vector<8xf32>
    %6 = vector.multi_reduction <add>, %1, %cst [1] : vector<8x32xf32> to vector<8xf32>
    %7 = vector.shape_cast %6 : vector<8xf32> to vector<8x1xf32>
    %cst_6 = arith.constant 3.200000e+01 : f32
    %8 = vector.broadcast %cst_6 : f32 to vector<8x1xf32>
    %9 = arith.divf %7, %8 : vector<8x1xf32>
    %10 = vector.broadcast %9 : vector<8x1xf32> to vector<8x32xf32>
    %11 = arith.subf %1, %10 : vector<8x32xf32>
    %12 = arith.mulf %11, %11 : vector<8x32xf32>
    %cst_7 = arith.constant dense<0.000000e+00> : vector<8xf32>
    %13 = vector.multi_reduction <add>, %12, %cst_7 [1] : vector<8x32xf32> to vector<8xf32>
    %14 = vector.shape_cast %13 : vector<8xf32> to vector<8x1xf32>
    %cst_8 = arith.constant 3.200000e+01 : f32
    %15 = vector.broadcast %cst_8 : f32 to vector<8x1xf32>
    %16 = arith.divf %14, %15 : vector<8x1xf32>
    %17 = vector.broadcast %9 : vector<8x1xf32> to vector<8x32xf32>
    %18 = arith.subf %1, %17 : vector<8x32xf32>
    %cst_9 = arith.constant 9.99999974E-6 : f32
    %19 = vector.broadcast %cst_9 : f32 to vector<8x1xf32>
    %20 = arith.addf %16, %19 : vector<8x1xf32>
    %21 = math.rsqrt %20 : vector<8x1xf32>
    %22 = vector.broadcast %21 : vector<8x1xf32> to vector<8x32xf32>
    %23 = arith.mulf %18, %22 : vector<8x32xf32>
    %24 = vector.shape_cast %3 : vector<32xf32> to vector<1x32xf32>
    %25 = vector.broadcast %24 : vector<1x32xf32> to vector<8x32xf32>
    %26 = arith.mulf %23, %25 : vector<8x32xf32>
    %27 = vector.shape_cast %5 : vector<32xf32> to vector<1x32xf32>
    %28 = vector.broadcast %27 : vector<1x32xf32> to vector<8x32xf32>
    %29 = arith.addf %26, %28 : vector<8x32xf32>
    %30 = arith.truncf %29 : vector<8x32xf32> to vector<8x32xbf16>
    %c0_10 = arith.constant 0 : index
    %c0_11 = arith.constant 0 : index
    %31 = vector.load %arg4[%c0_10, %c0_11] : memref<32x96xbf16, #tpu.memory_space<vmem>>, vector<32x96xbf16>
    %cst_12 = arith.constant dense<0.000000e+00> : vector<8x96xf32>
    %32 = tpu.matmul %30, %31, %cst_12 {dimension_numbers = #tpu.dot_dimension_numbers<[1], [0], [0], [1], [0, 0, 1, 1], [], []>} : vector<8x32xbf16>, vector<32x96xbf16>, vector<8x96xf32> -> vector<8x96xf32>
    %33 = tpu.iota {dimensions = array<i32: 0>} : vector<8x8xi32>
    %34 = tpu.iota {dimensions = array<i32: 1>} : vector<8x8xi32>
    %35 = arith.cmpi sge, %33, %34 : vector<8x8xi32>
    %cst_13 = arith.constant 0.000000e+00 : f32
    %cst_14 = arith.constant -1.000000e+30 : f32
    %36 = vector.broadcast %cst_13 : f32 to vector<8x8xf32>
    %37 = vector.broadcast %cst_14 : f32 to vector<8x8xf32>
    %38 = arith.select %35, %36, %37 : vector<8x8xi1>, vector<8x8xf32>
    %39 = vector.extract_strided_slice %32 {offsets = [0, 0], sizes = [8, 8], strides = [1, 1]} : vector<8x96xf32> to vector<8x8xf32>
    %40 = vector.extract_strided_slice %32 {offsets = [0, 8], sizes = [8, 8], strides = [1, 1]} : vector<8x96xf32> to vector<8x8xf32>
    %41 = vector.extract_strided_slice %32 {offsets = [0, 16], sizes = [8, 8], strides = [1, 1]} : vector<8x96xf32> to vector<8x8xf32>
    %42 = vector.extract_strided_slice %32 {offsets = [0, 24], sizes = [8, 8], strides = [1, 1]} : vector<8x96xf32> to vector<8x8xf32>
    %43 = vector.shape_cast %39 : vector<8x8xf32> to vector<1x8x8xf32>
    %44 = vector.shape_cast %40 : vector<8x8xf32> to vector<1x8x8xf32>
    %45 = vector.shape_cast %41 : vector<8x8xf32> to vector<1x8x8xf32>
    %46 = vector.shape_cast %42 : vector<8x8xf32> to vector<1x8x8xf32>
    %47 = tpu.concatenate %43, %44, %45, %46 in 0 : vector<1x8x8xf32>, vector<1x8x8xf32>, vector<1x8x8xf32>, vector<1x8x8xf32> -> vector<4x8x8xf32>
    %48 = vector.extract_strided_slice %32 {offsets = [0, 32], sizes = [8, 8], strides = [1, 1]} : vector<8x96xf32> to vector<8x8xf32>
    %49 = vector.extract_strided_slice %32 {offsets = [0, 40], sizes = [8, 8], strides = [1, 1]} : vector<8x96xf32> to vector<8x8xf32>
    %50 = vector.extract_strided_slice %32 {offsets = [0, 48], sizes = [8, 8], strides = [1, 1]} : vector<8x96xf32> to vector<8x8xf32>
    %51 = vector.extract_strided_slice %32 {offsets = [0, 56], sizes = [8, 8], strides = [1, 1]} : vector<8x96xf32> to vector<8x8xf32>
    %52 = vector.shape_cast %48 : vector<8x8xf32> to vector<1x8x8xf32>
    %53 = vector.shape_cast %49 : vector<8x8xf32> to vector<1x8x8xf32>
    %54 = vector.shape_cast %50 : vector<8x8xf32> to vector<1x8x8xf32>
    %55 = vector.shape_cast %51 : vector<8x8xf32> to vector<1x8x8xf32>
    %56 = tpu.concatenate %52, %53, %54, %55 in 0 : vector<1x8x8xf32>, vector<1x8x8xf32>, vector<1x8x8xf32>, vector<1x8x8xf32> -> vector<4x8x8xf32>
    %57 = vector.extract_strided_slice %32 {offsets = [0, 64], sizes = [8, 8], strides = [1, 1]} : vector<8x96xf32> to vector<8x8xf32>
    %58 = vector.extract_strided_slice %32 {offsets = [0, 72], sizes = [8, 8], strides = [1, 1]} : vector<8x96xf32> to vector<8x8xf32>
    %59 = vector.extract_strided_slice %32 {offsets = [0, 80], sizes = [8, 8], strides = [1, 1]} : vector<8x96xf32> to vector<8x8xf32>
    %60 = vector.extract_strided_slice %32 {offsets = [0, 88], sizes = [8, 8], strides = [1, 1]} : vector<8x96xf32> to vector<8x8xf32>
    %61 = vector.shape_cast %57 : vector<8x8xf32> to vector<1x8x8xf32>
    %62 = vector.shape_cast %58 : vector<8x8xf32> to vector<1x8x8xf32>
    %63 = vector.shape_cast %59 : vector<8x8xf32> to vector<1x8x8xf32>
    %64 = vector.shape_cast %60 : vector<8x8xf32> to vector<1x8x8xf32>
    %65 = tpu.concatenate %61, %62, %63, %64 in 0 : vector<1x8x8xf32>, vector<1x8x8xf32>, vector<1x8x8xf32>, vector<1x8x8xf32> -> vector<4x8x8xf32>
    "tpu.trace_start"() <{level = 10 : i32, message = "hqd,hkd->hqk"}> : () -> ()
    %cst_15 = arith.constant dense<0.000000e+00> : vector<4x8x8xf32>
    %66 = tpu.matmul %47, %56, %cst_15 {dimension_numbers = #tpu.dot_dimension_numbers<[2], [2], [1], [1], [0, 0, 0, 1, 1, 1], [0], [0]>} : vector<4x8x8xf32>, vector<4x8x8xf32>, vector<4x8x8xf32> -> vector<4x8x8xf32>
    "tpu.trace_stop"() : () -> ()
    %cst_16 = arith.constant 0.176776692 : f32
    %67 = vector.broadcast %cst_16 : f32 to vector<4x8x8xf32>
    %68 = arith.mulf %66, %67 : vector<4x8x8xf32>
    %69 = vector.shape_cast %38 : vector<8x8xf32> to vector<1x8x8xf32>
    %70 = vector.broadcast %69 : vector<1x8x8xf32> to vector<4x8x8xf32>
    %71 = arith.addf %68, %70 : vector<4x8x8xf32>
    %cst_17 = arith.constant dense<0xFF800000> : vector<4x8xf32>
    %72 = vector.multi_reduction <maximumf>, %71, %cst_17 [2] : vector<4x8x8xf32> to vector<4x8xf32>
    %73 = vector.shape_cast %72 : vector<4x8xf32> to vector<4x8x1xf32>
    %74 = vector.broadcast %73 : vector<4x8x1xf32> to vector<4x8x8xf32>
    %75 = arith.subf %71, %74 : vector<4x8x8xf32>
    %76 = math.exp %75 : vector<4x8x8xf32>
    %cst_18 = arith.constant dense<0.000000e+00> : vector<4x8xf32>
    %77 = vector.multi_reduction <add>, %76, %cst_18 [2] : vector<4x8x8xf32> to vector<4x8xf32>
    %78 = vector.shape_cast %77 : vector<4x8xf32> to vector<4x8x1xf32>
    "tpu.trace_start"() <{level = 10 : i32, message = "hqk,hkd->hqd"}> : () -> ()
    %cst_19 = arith.constant dense<0.000000e+00> : vector<4x8x8xf32>
    %79 = tpu.matmul %76, %65, %cst_19 {dimension_numbers = #tpu.dot_dimension_numbers<[2], [1], [1], [2], [0, 0, 0, 1, 1, 2], [0], [0]>} : vector<4x8x8xf32>, vector<4x8x8xf32>, vector<4x8x8xf32> -> vector<4x8x8xf32>
    "tpu.trace_stop"() : () -> ()
    %80 = tpu.reciprocal %78 {approx = true} : vector<4x8x1xf32> -> vector<4x8x1xf32>
    %81 = vector.broadcast %80 : vector<4x8x1xf32> to vector<4x8x8xf32>
    %82 = arith.mulf %79, %81 : vector<4x8x8xf32>
    %83 = vector.extract_strided_slice %82 {offsets = [0, 0, 0], sizes = [1, 8, 8], strides = [1, 1, 1]} : vector<4x8x8xf32> to vector<1x8x8xf32>
    %84 = vector.shape_cast %83 : vector<1x8x8xf32> to vector<8x8xf32>
    %85 = vector.extract_strided_slice %82 {offsets = [1, 0, 0], sizes = [1, 8, 8], strides = [1, 1, 1]} : vector<4x8x8xf32> to vector<1x8x8xf32>
    %86 = vector.shape_cast %85 : vector<1x8x8xf32> to vector<8x8xf32>
    %87 = vector.extract_strided_slice %82 {offsets = [2, 0, 0], sizes = [1, 8, 8], strides = [1, 1, 1]} : vector<4x8x8xf32> to vector<1x8x8xf32>
    %88 = vector.shape_cast %87 : vector<1x8x8xf32> to vector<8x8xf32>
    %89 = vector.extract_strided_slice %82 {offsets = [3, 0, 0], sizes = [1, 8, 8], strides = [1, 1, 1]} : vector<4x8x8xf32> to vector<1x8x8xf32>
    %90 = vector.shape_cast %89 : vector<1x8x8xf32> to vector<8x8xf32>
    %91 = tpu.concatenate %84, %86, %88, %90 in 1 : vector<8x8xf32>, vector<8x8xf32>, vector<8x8xf32>, vector<8x8xf32> -> vector<8x32xf32>
    %92 = arith.truncf %91 : vector<8x32xf32> to vector<8x32xbf16>
    %c0_20 = arith.constant 0 : index
    %c0_21 = arith.constant 0 : index
    %93 = vector.load %arg5[%c0_20, %c0_21] : memref<32x32xbf16, #tpu.memory_space<vmem>>, vector<32x32xbf16>
    %cst_22 = arith.constant dense<0.000000e+00> : vector<8x32xf32>
    %94 = tpu.matmul %92, %93, %cst_22 {dimension_numbers = #tpu.dot_dimension_numbers<[1], [0], [0], [1], [0, 0, 1, 1], [], []>} : vector<8x32xbf16>, vector<32x32xbf16>, vector<8x32xf32> -> vector<8x32xf32>
    %c0_23 = arith.constant 0 : index
    %c0_24 = arith.constant 0 : index
    %95 = vector.load %arg6[%c0_23, %c0_24] : memref<1x32xf32, #tpu.memory_space<vmem>>, vector<1x32xf32>
    %96 = vector.shape_cast %95 : vector<1x32xf32> to vector<32xf32>
    %97 = vector.shape_cast %96 : vector<32xf32> to vector<1x32xf32>
    %98 = vector.broadcast %97 : vector<1x32xf32> to vector<8x32xf32>
    %99 = arith.addf %94, %98 : vector<8x32xf32>
    %100 = arith.addf %29, %99 : vector<8x32xf32>
    %c0_25 = arith.constant 0 : index
    %c0_26 = arith.constant 0 : index
    %101 = vector.load %arg7[%c0_25, %c0_26] : memref<1x32xf32, #tpu.memory_space<vmem>>, vector<1x32xf32>
    %102 = vector.shape_cast %101 : vector<1x32xf32> to vector<32xf32>
    %c0_27 = arith.constant 0 : index
    %c0_28 = arith.constant 0 : index
    %103 = vector.load %arg8[%c0_27, %c0_28] : memref<1x32xf32, #tpu.memory_space<vmem>>, vector<1x32xf32>
    %104 = vector.shape_cast %103 : vector<1x32xf32> to vector<32xf32>
    %cst_29 = arith.constant dense<0.000000e+00> : vector<8xf32>
    %105 = vector.multi_reduction <add>, %100, %cst_29 [1] : vector<8x32xf32> to vector<8xf32>
    %106 = vector.shape_cast %105 : vector<8xf32> to vector<8x1xf32>
    %cst_30 = arith.constant 3.200000e+01 : f32
    %107 = vector.broadcast %cst_30 : f32 to vector<8x1xf32>
    %108 = arith.divf %106, %107 : vector<8x1xf32>
    %109 = vector.broadcast %108 : vector<8x1xf32> to vector<8x32xf32>
    %110 = arith.subf %100, %109 : vector<8x32xf32>
    %111 = arith.mulf %110, %110 : vector<8x32xf32>
    %cst_31 = arith.constant dense<0.000000e+00> : vector<8xf32>
    %112 = vector.multi_reduction <add>, %111, %cst_31 [1] : vector<8x32xf32> to vector<8xf32>
    %113 = vector.shape_cast %112 : vector<8xf32> to vector<8x1xf32>
    %cst_32 = arith.constant 3.200000e+01 : f32
    %114 = vector.broadcast %cst_32 : f32 to vector<8x1xf32>
    %115 = arith.divf %113, %114 : vector<8x1xf32>
    %116 = vector.broadcast %108 : vector<8x1xf32> to vector<8x32xf32>
    %117 = arith.subf %100, %116 : vector<8x32xf32>
    %cst_33 = arith.constant 9.99999974E-6 : f32
    %118 = vector.broadcast %cst_33 : f32 to vector<8x1xf32>
    %119 = arith.addf %115, %118 : vector<8x1xf32>
    %120 = math.rsqrt %119 : vector<8x1xf32>
    %121 = vector.broadcast %120 : vector<8x1xf32> to vector<8x32xf32>
    %122 = arith.mulf %117, %121 : vector<8x32xf32>
    %123 = vector.shape_cast %102 : vector<32xf32> to vector<1x32xf32>
    %124 = vector.broadcast %123 : vector<1x32xf32> to vector<8x32xf32>
    %125 = arith.mulf %122, %124 : vector<8x32xf32>
    %126 = vector.shape_cast %104 : vector<32xf32> to vector<1x32xf32>
    %127 = vector.broadcast %126 : vector<1x32xf32> to vector<8x32xf32>
    %128 = arith.addf %125, %127 : vector<8x32xf32>
    %129 = arith.truncf %128 : vector<8x32xf32> to vector<8x32xbf16>
    %c0_34 = arith.constant 0 : index
    %c0_35 = arith.constant 0 : index
    %130 = vector.load %arg9[%c0_34, %c0_35] : memref<32x128xbf16, #tpu.memory_space<vmem>>, vector<32x128xbf16>
    %cst_36 = arith.constant dense<0.000000e+00> : vector<8x128xf32>
    %131 = tpu.matmul %129, %130, %cst_36 {dimension_numbers = #tpu.dot_dimension_numbers<[1], [0], [0], [1], [0, 0, 1, 1], [], []>} : vector<8x32xbf16>, vector<32x128xbf16>, vector<8x128xf32> -> vector<8x128xf32>
    %c0_37 = arith.constant 0 : index
    %c0_38 = arith.constant 0 : index
    %132 = vector.load %arg10[%c0_37, %c0_38] : memref<1x128xf32, #tpu.memory_space<vmem>>, vector<1x128xf32>
    %133 = vector.shape_cast %132 : vector<1x128xf32> to vector<128xf32>
    %134 = vector.shape_cast %133 : vector<128xf32> to vector<1x128xf32>
    %135 = vector.broadcast %134 : vector<1x128xf32> to vector<8x128xf32>
    %136 = arith.addf %131, %135 : vector<8x128xf32>
    %cst_39 = arith.constant 0.000000e+00 : f32
    %137 = vector.broadcast %cst_39 : f32 to vector<8x128xf32>
    %138 = arith.maximumf %136, %137 : vector<8x128xf32>
    %139 = arith.truncf %138 : vector<8x128xf32> to vector<8x128xbf16>
    %c0_40 = arith.constant 0 : index
    %c0_41 = arith.constant 0 : index
    %140 = vector.load %arg11[%c0_40, %c0_41] : memref<128x32xbf16, #tpu.memory_space<vmem>>, vector<128x32xbf16>
    %cst_42 = arith.constant dense<0.000000e+00> : vector<8x32xf32>
    %141 = tpu.matmul %139, %140, %cst_42 {dimension_numbers = #tpu.dot_dimension_numbers<[1], [0], [0], [1], [0, 0, 1, 1], [], []>} : vector<8x128xbf16>, vector<128x32xbf16>, vector<8x32xf32> -> vector<8x32xf32>
    %c0_43 = arith.constant 0 : index
    %c0_44 = arith.constant 0 : index
    %142 = vector.load %arg12[%c0_43, %c0_44] : memref<1x32xf32, #tpu.memory_space<vmem>>, vector<1x32xf32>
    %143 = vector.shape_cast %142 : vector<1x32xf32> to vector<32xf32>
    %144 = vector.shape_cast %143 : vector<32xf32> to vector<1x32xf32>
    %145 = vector.broadcast %144 : vector<1x32xf32> to vector<8x32xf32>
    %146 = arith.addf %141, %145 : vector<8x32xf32>
    %147 = arith.addf %128, %146 : vector<8x32xf32>
    %c0_45 = arith.constant 0 : index
    %c0_46 = arith.constant 0 : index
    %c0_47 = arith.constant 0 : index
    %148 = vector.load %arg13[%c0_45, %c0_46, %c0_47] : memref<1x8x32xf32, #tpu.memory_space<vmem>>, vector<1x8x32xf32>
    %149 = vector.shape_cast %148 : vector<1x8x32xf32> to vector<8x32xf32>
    %150 = vector.shape_cast %147 : vector<8x32xf32> to vector<1x8x32xf32>
    tpu.vector_store %arg13[%c0_45, %c0_46, %c0_47], %150 {strides = array<i32>} : memref<1x8x32xf32, #tpu.memory_space<vmem>>, vector<1x8x32xf32>,
    return
  }
  func.func @transform_0(%arg0: i32) -> (i32, i32, i32) {
    %c0_i32 = arith.constant 0 : i32
    %c0_i32_0 = arith.constant 0 : i32
    %c0_i32_1 = arith.constant 0 : i32
    return %arg0, %c0_i32, %c0_i32_0 : i32, i32, i32
  }
  func.func @transform_1(%arg0: i32) -> (i32, i32) {
    %c0_i32 = arith.constant 0 : i32
    %c0_i32_0 = arith.constant 0 : i32
    %c0_i32_1 = arith.constant 0 : i32
    return %c0_i32, %c0_i32_0 : i32, i32
  }
  func.func @transform_2(%arg0: i32) -> (i32, i32) {
    %c0_i32 = arith.constant 0 : i32
    %c0_i32_0 = arith.constant 0 : i32
    %c0_i32_1 = arith.constant 0 : i32
    return %c0_i32, %c0_i32_0 : i32, i32
  }
  func.func @transform_3(%arg0: i32) -> (i32, i32) {
    %c0_i32 = arith.constant 0 : i32
    %c0_i32_0 = arith.constant 0 : i32
    %c0_i32_1 = arith.constant 0 : i32
    return %c0_i32, %c0_i32_0 : i32, i32
  }
  func.func @transform_4(%arg0: i32) -> (i32, i32) {
    %c0_i32 = arith.constant 0 : i32
    %c0_i32_0 = arith.constant 0 : i32
    %c0_i32_1 = arith.constant 0 : i32
    return %c0_i32, %c0_i32_0 : i32, i32
  }
  func.func @transform_5(%arg0: i32) -> (i32, i32) {
    %c0_i32 = arith.constant 0 : i32
    %c0_i32_0 = arith.constant 0 : i32
    %c0_i32_1 = arith.constant 0 : i32
    return %c0_i32, %c0_i32_0 : i32, i32
  }
  func.func @transform_6(%arg0: i32) -> (i32, i32) {
    %c0_i32 = arith.constant 0 : i32
    %c0_i32_0 = arith.constant 0 : i32
    %c0_i32_1 = arith.constant 0 : i32
    return %c0_i32, %c0_i32_0 : i32, i32
  }
  func.func @transform_7(%arg0: i32) -> (i32, i32) {
    %c0_i32 = arith.constant 0 : i32
    %c0_i32_0 = arith.constant 0 : i32
    %c0_i32_1 = arith.constant 0 : i32
    return %c0_i32, %c0_i32_0 : i32, i32
  }
  func.func @transform_8(%arg0: i32) -> (i32, i32) {
    %c0_i32 = arith.constant 0 : i32
    %c0_i32_0 = arith.constant 0 : i32
    %c0_i32_1 = arith.constant 0 : i32
    return %c0_i32, %c0_i32_0 : i32, i32
  }
  func.func @transform_9(%arg0: i32) -> (i32, i32) {
    %c0_i32 = arith.constant 0 : i32
    %c0_i32_0 = arith.constant 0 : i32
    %c0_i32_1 = arith.constant 0 : i32
    return %c0_i32, %c0_i32_0 : i32, i32
  }
  func.func @transform_10(%arg0: i32) -> (i32, i32) {
    %c0_i32 = arith.constant 0 : i32
    %c0_i32_0 = arith.constant 0 : i32
    %c0_i32_1 = arith.constant 0 : i32
    return %c0_i32, %c0_i32_0 : i32, i32
  }
  func.func @transform_11(%arg0: i32) -> (i32, i32) {
    %c0_i32 = arith.constant 0 : i32
    %c0_i32_0 = arith.constant 0 : i32
    %c0_i32_1 = arith.constant 0 : i32
    return %c0_i32, %c0_i32_0 : i32, i32
  }
  func.func @transform_12(%arg0: i32) -> (i32, i32, i32) {
    %c0_i32 = arith.constant 0 : i32
    %c0_i32_0 = arith.constant 0 : i32
    %c0_i32_1 = arith.constant 0 : i32
    return %arg0, %c0_i32, %c0_i32_0 : i32, i32, i32
  }
}

</mosaic_0001>

<llo_original>
// kernel: tpu_custom_call.1
$region0: #{tpu_custom_call.1}
  #allocation0 [shape = 'u32[]', space=smem, size = 0x4, offset = 0x4, fixed_abs, tag = 'smem constant byte address 0x4 - core index']
  #allocation1 [shape = 'u32[72,128]{1,0:T(1,128)}', space=vmem, size = 0x9000, scoped, tag = 'internal scratch']
  %s0 = inlined_call_operand.vmem [shape: f32[2,8,32], index: 0, kind: input, shape index: {}]
  %s1 = inlined_call_operand.vmem [shape: f32[1,32], index: 1, kind: input, shape index: {}]
  %s2 = inlined_call_operand.vmem [shape: f32[1,32], index: 2, kind: input, shape index: {}]
  %s3 = inlined_call_operand.vmem [shape: bf16[32,96], index: 3, kind: input, shape index: {}]
  %s4 = inlined_call_operand.vmem [shape: bf16[32,32], index: 4, kind: input, shape index: {}]
  %s5 = inlined_call_operand.vmem [shape: f32[1,32], index: 5, kind: input, shape index: {}]
  %s6 = inlined_call_operand.vmem [shape: f32[1,32], index: 6, kind: input, shape index: {}]
  %s7 = inlined_call_operand.vmem [shape: f32[1,32], index: 7, kind: input, shape index: {}]
  %s8 = inlined_call_operand.vmem [shape: bf16[32,128], index: 8, kind: input, shape index: {}]
  %s9 = inlined_call_operand.vmem [shape: f32[1,128], index: 9, kind: input, shape index: {}]
  %s10 = inlined_call_operand.vmem [shape: bf16[128,32], index: 10, kind: input, shape index: {}]
  %s11 = inlined_call_operand.vmem [shape: f32[1,32], index: 11, kind: input, shape index: {}]
  %s12 = inlined_call_operand.hbm [shape: f32[2,8,32], index: 12, kind: output, shape index: {}]
  %s13 = sld [smem:[#allocation0]]
  $region81: #{tpu_custom_call.1} parent=0
    _
  %s15 = ssub.s32 1, %s13
  %s16 = scalar_select 0, %s15, %s13
  $region1: #{tpu_custom_call.1} parent=0
    #allocation2 [shape = 'u8[8192]{0}', space=vmem, size = 0x2000, scoped, tag = 'output window, operand 0']
    #allocation3 [shape = 's32[2]{0}', space=sflag, size = 0x8, scoped, tag = 'scoped memory for tpu_custom_call.1']
    %17 = vsyncpa [#allocation3], 0
    %s18 = scalar_lea.sflag [#allocation3], 1
    %19 = vsyncpa %s18, 0
    loop: start=0, step=1, limit=4
    $region2: #{tpu_custom_call.1} parent=1 // loop_pre_header
      _
    $region3: #{tpu_custom_call.1} parent=1 // loop_header
      %s21 = sphi 0, %s25
      %p22 = scmp.ge.s32.totalorder %s21, 4
      %s31 = sphi 0, %s33
      %s34 = sphi 0, %s31
      %s35 = sphi 0, %s34
      %s51 = sphi 0, %s35
      %s55 = sphi 0, %s55
      %s57 = sphi 0, %s55
      %s58 = sphi 0, %s57
      %s72 = sphi 0, %s58
      %s76 = sphi 0, %s76
      %s78 = sphi 0, %s76
      %s79 = sphi 0, %s78
      %s93 = sphi 0, %s79
      %s97 = sphi 0, %s97
      %s99 = sphi 0, %s97
      %s100 = sphi 0, %s99
      %s114 = sphi 0, %s100
      %s118 = sphi 0, %s118
      %s120 = sphi 0, %s118
      %s121 = sphi 0, %s120
      %s135 = sphi 0, %s121
      %s139 = sphi 0, %s139
      %s141 = sphi 0, %s139
      %s142 = sphi 0, %s141
      %s156 = sphi 0, %s142
      %s160 = sphi 0, %s160
      %s162 = sphi 0, %s160
      %s163 = sphi 0, %s162
      %s177 = sphi 0, %s163
      %s181 = sphi 0, %s181
      %s183 = sphi 0, %s181
      %s184 = sphi 0, %s183
      %s198 = sphi 0, %s184
      %s202 = sphi 0, %s202
      %s204 = sphi 0, %s202
      %s205 = sphi 0, %s204
      %s219 = sphi 0, %s205
      %s223 = sphi 0, %s223
      %s225 = sphi 0, %s223
      %s226 = sphi 0, %s225
      %s240 = sphi 0, %s226
      %s244 = sphi 0, %s244
      %s246 = sphi 0, %s244
      %s247 = sphi 0, %s246
      %s261 = sphi 0, %s247
      %s265 = sphi 0, %s265
      %s267 = sphi 0, %s265
      %s268 = sphi 0, %s267
      %s282 = sphi 0, %s268
      %s288 = sphi 0, %s290
      %s291 = sphi 0, %s288
      %s292 = sphi 0, %s291
      %s308 = sphi 0, %s292
    $region4: #{tpu_custom_call.1} parent=1 // loop_header_branch
      %24 = sbr.rel (%p22) target = $region8
    $region5: #{tpu_custom_call.1} parent=1 // loop_body
      %s26 = ssub.s32 %s21, 1
      %s27 = ssub.s32 %s21, 2
      %s28 = sadd.s32 %s21, 1
      %s29 = ssub.s32 %s21, %s28
      %p30 = scmp.eq.s32.totalorder %s29, 0
      %s32 = sadd.s32 %s31, 1
      %s33 = scalar_select %p30, %s31, %s32
      %p36 = pneg %p30
      %p37 = scmp.eq.s32.totalorder %s21, 1
      %p38 = por %p36, %p37
      %p39 = scmp.ne.s32.totalorder %s31, %s34
      %p40 = scmp.eq.s32.totalorder %s21, 0
      %p41 = por %p39, %p40
      %p42 = scmp.ne.s32.totalorder %s31, %s34
      %p43 = scmp.eq.s32.totalorder %s26, 1
      %p44 = por %p42, %p43
      %p45 = scmp.ne.s32.totalorder %s34, %s35
      %p46 = scmp.eq.s32.totalorder %s26, 0
      %p47 = por %p45, %p46
      %p48 = scmp.ne.s32.totalorder %s34, %s35
      %p49 = scmp.eq.s32.totalorder %s27, 1
      %p50 = por %p48, %p49
      %p52 = scmp.ne.s32.totalorder %s35, %s51
      %p53 = scmp.eq.s32.totalorder %s27, 0
      %p54 = por %p52, %p53
      %s56 = sadd.s32 %s55, 1
      %p59 = scmp.eq.s32.totalorder %s21, 1
      %p60 = scmp.ne.s32.totalorder %s55, %s57
      %p61 = scmp.eq.s32.totalorder %s21, 0
      %p62 = por %p60, %p61
      %p63 = scmp.ne.s32.totalorder %s55, %s57
      %p64 = scmp.eq.s32.totalorder %s26, 1
      %p65 = por %p63, %p64
      %p66 = scmp.ne.s32.totalorder %s57, %s58
      %p67 = scmp.eq.s32.totalorder %s26, 0
      %p68 = por %p66, %p67
      %p69 = scmp.ne.s32.totalorder %s57, %s58
      %p70 = scmp.eq.s32.totalorder %s27, 1
      %p71 = por %p69, %p70
      %p73 = scmp.ne.s32.totalorder %s58, %s72
      %p74 = scmp.eq.s32.totalorder %s27, 0
      %p75 = por %p73, %p74
      %s77 = sadd.s32 %s76, 1
      %p80 = scmp.eq.s32.totalorder %s21, 1
      %p81 = scmp.ne.s32.totalorder %s76, %s78
      %p82 = scmp.eq.s32.totalorder %s21, 0
      %p83 = por %p81, %p82
      %p84 = scmp.ne.s32.totalorder %s76, %s78
      %p85 = scmp.eq.s32.totalorder %s26, 1
      %p86 = por %p84, %p85
      %p87 = scmp.ne.s32.totalorder %s78, %s79
      %p88 = scmp.eq.s32.totalorder %s26, 0
      %p89 = por %p87, %p88
      %p90 = scmp.ne.s32.totalorder %s78, %s79
      %p91 = scmp.eq.s32.totalorder %s27, 1
      %p92 = por %p90, %p91
      %p94 = scmp.ne.s32.totalorder %s79, %s93
      %p95 = scmp.eq.s32.totalorder %s27, 0
      %p96 = por %p94, %p95
      %s98 = sadd.s32 %s97, 1
      %p101 = scmp.eq.s32.totalorder %s21, 1
      %p102 = scmp.ne.s32.totalorder %s97, %s99
      %p103 = scmp.eq.s32.totalorder %s21, 0
      %p104 = por %p102, %p103
      %p105 = scmp.ne.s32.totalorder %s97, %s99
      %p106 = scmp.eq.s32.totalorder %s26, 1
      %p107 = por %p105, %p106
      %p108 = scmp.ne.s32.totalorder %s99, %s100
      %p109 = scmp.eq.s32.totalorder %s26, 0
      %p110 = por %p108, %p109
      %p111 = scmp.ne.s32.totalorder %s99, %s100
      %p112 = scmp.eq.s32.totalorder %s27, 1
      %p113 = por %p111, %p112
      %p115 = scmp.ne.s32.totalorder %s100, %s114
      %p116 = scmp.eq.s32.totalorder %s27, 0
      %p117 = por %p115, %p116
      %s119 = sadd.s32 %s118, 1
      %p122 = scmp.eq.s32.totalorder %s21, 1
      %p123 = scmp.ne.s32.totalorder %s118, %s120
      %p124 = scmp.eq.s32.totalorder %s21, 0
      %p125 = por %p123, %p124
      %p126 = scmp.ne.s32.totalorder %s118, %s120
      %p127 = scmp.eq.s32.totalorder %s26, 1
      %p128 = por %p126, %p127
      %p129 = scmp.ne.s32.totalorder %s120, %s121
      %p130 = scmp.eq.s32.totalorder %s26, 0
      %p131 = por %p129, %p130
      %p132 = scmp.ne.s32.totalorder %s120, %s121
      %p133 = scmp.eq.s32.totalorder %s27, 1
      %p134 = por %p132, %p133
      %p136 = scmp.ne.s32.totalorder %s121, %s135
      %p137 = scmp.eq.s32.totalorder %s27, 0
      %p138 = por %p136, %p137
      %s140 = sadd.s32 %s139, 1
      %p143 = scmp.eq.s32.totalorder %s21, 1
      %p144 = scmp.ne.s32.totalorder %s139, %s141
      %p145 = scmp.eq.s32.totalorder %s21, 0
      %p146 = por %p144, %p145
      %p147 = scmp.ne.s32.totalorder %s139, %s141
      %p148 = scmp.eq.s32.totalorder %s26, 1
      %p149 = por %p147, %p148
      %p150 = scmp.ne.s32.totalorder %s141, %s142
      %p151 = scmp.eq.s32.totalorder %s26, 0
      %p152 = por %p150, %p151
      %p153 = scmp.ne.s32.totalorder %s141, %s142
      %p154 = scmp.eq.s32.totalorder %s27, 1
      %p155 = por %p153, %p154
      %p157 = scmp.ne.s32.totalorder %s142, %s156
      %p158 = scmp.eq.s32.totalorder %s27, 0
      %p159 = por %p157, %p158
      %s161 = sadd.s32 %s160, 1
      %p164 = scmp.eq.s32.totalorder %s21, 1
      %p165 = scmp.ne.s32.totalorder %s160, %s162
      %p166 = scmp.eq.s32.totalorder %s21, 0
      %p167 = por %p165, %p166
      %p168 = scmp.ne.s32.totalorder %s160, %s162
      %p169 = scmp.eq.s32.totalorder %s26, 1
      %p170 = por %p168, %p169
      %p171 = scmp.ne.s32.totalorder %s162, %s163
      %p172 = scmp.eq.s32.totalorder %s26, 0
      %p173 = por %p171, %p172
      %p174 = scmp.ne.s32.totalorder %s162, %s163
      %p175 = scmp.eq.s32.totalorder %s27, 1
      %p176 = por %p174, %p175
      %p178 = scmp.ne.s32.totalorder %s163, %s177
      %p179 = scmp.eq.s32.totalorder %s27, 0
      %p180 = por %p178, %p179
      %s182 = sadd.s32 %s181, 1
      %p185 = scmp.eq.s32.totalorder %s21, 1
      %p186 = scmp.ne.s32.totalorder %s181, %s183
      %p187 = scmp.eq.s32.totalorder %s21, 0
      %p188 = por %p186, %p187
      %p189 = scmp.ne.s32.totalorder %s181, %s183
      %p190 = scmp.eq.s32.totalorder %s26, 1
      %p191 = por %p189, %p190
      %p192 = scmp.ne.s32.totalorder %s183, %s184
      %p193 = scmp.eq.s32.totalorder %s26, 0
      %p194 = por %p192, %p193
      %p195 = scmp.ne.s32.totalorder %s183, %s184
      %p196 = scmp.eq.s32.totalorder %s27, 1
      %p197 = por %p195, %p196
      %p199 = scmp.ne.s32.totalorder %s184, %s198
      %p200 = scmp.eq.s32.totalorder %s27, 0
      %p201 = por %p199, %p200
      %s203 = sadd.s32 %s202, 1
      %p206 = scmp.eq.s32.totalorder %s21, 1
      %p207 = scmp.ne.s32.totalorder %s202, %s204
      %p208 = scmp.eq.s32.totalorder %s21, 0
      %p209 = por %p207, %p208
      %p210 = scmp.ne.s32.totalorder %s202, %s204
      %p211 = scmp.eq.s32.totalorder %s26, 1
      %p212 = por %p210, %p211
      %p213 = scmp.ne.s32.totalorder %s204, %s205
      %p214 = scmp.eq.s32.totalorder %s26, 0
      %p215 = por %p213, %p214
      %p216 = scmp.ne.s32.totalorder %s204, %s205
      %p217 = scmp.eq.s32.totalorder %s27, 1
      %p218 = por %p216, %p217
      %p220 = scmp.ne.s32.totalorder %s205, %s219
      %p221 = scmp.eq.s32.totalorder %s27, 0
      %p222 = por %p220, %p221
      %s224 = sadd.s32 %s223, 1
      %p227 = scmp.eq.s32.totalorder %s21, 1
      %p228 = scmp.ne.s32.totalorder %s223, %s225
      %p229 = scmp.eq.s32.totalorder %s21, 0
      %p230 = por %p228, %p229
      %p231 = scmp.ne.s32.totalorder %s223, %s225
      %p232 = scmp.eq.s32.totalorder %s26, 1
      %p233 = por %p231, %p232
      %p234 = scmp.ne.s32.totalorder %s225, %s226
      %p235 = scmp.eq.s32.totalorder %s26, 0
      %p236 = por %p234, %p235
      %p237 = scmp.ne.s32.totalorder %s225, %s226
      %p238 = scmp.eq.s32.totalorder %s27, 1
      %p239 = por %p237, %p238
      %p241 = scmp.ne.s32.totalorder %s226, %s240
      %p242 = scmp.eq.s32.totalorder %s27, 0
      %p243 = por %p241, %p242
      %s245 = sadd.s32 %s244, 1
      %p248 = scmp.eq.s32.totalorder %s21, 1
      %p249 = scmp.ne.s32.totalorder %s244, %s246
      %p250 = scmp.eq.s32.totalorder %s21, 0
      %p251 = por %p249, %p250
      %p252 = scmp.ne.s32.totalorder %s244, %s246
      %p253 = scmp.eq.s32.totalorder %s26, 1
      %p254 = por %p252, %p253
      %p255 = scmp.ne.s32.totalorder %s246, %s247
      %p256 = scmp.eq.s32.totalorder %s26, 0
      %p257 = por %p255, %p256
      %p258 = scmp.ne.s32.totalorder %s246, %s247
      %p259 = scmp.eq.s32.totalorder %s27, 1
      %p260 = por %p258, %p259
      %p262 = scmp.ne.s32.totalorder %s247, %s261
      %p263 = scmp.eq.s32.totalorder %s27, 0
      %p264 = por %p262, %p263
      %s266 = sadd.s32 %s265, 1
      %p269 = scmp.eq.s32.totalorder %s21, 1
      %p270 = scmp.ne.s32.totalorder %s265, %s267
      %p271 = scmp.eq.s32.totalorder %s21, 0
      %p272 = por %p270, %p271
      %p273 = scmp.ne.s32.totalorder %s265, %s267
      %p274 = scmp.eq.s32.totalorder %s26, 1
      %p275 = por %p273, %p274
      %p276 = scmp.ne.s32.totalorder %s267, %s268
      %p277 = scmp.eq.s32.totalorder %s26, 0
      %p278 = por %p276, %p277
      %p279 = scmp.ne.s32.totalorder %s267, %s268
      %p280 = scmp.eq.s32.totalorder %s27, 1
      %p281 = por %p279, %p280
      %p283 = scmp.ne.s32.totalorder %s268, %s282
      %p284 = scmp.eq.s32.totalorder %s27, 0
      %p285 = por %p283, %p284
      %s286 = ssub.s32 %s21, %s28
      %p287 = scmp.eq.s32.totalorder %s286, 0
      %s289 = sadd.s32 %s288, 1
      %s290 = scalar_select %p287, %s288, %s289
      %p293 = pneg %p287
      %p294 = scmp.eq.s32.totalorder %s21, 1
      %p295 = por %p293, %p294
      %p296 = scmp.ne.s32.totalorder %s288, %s291
      %p297 = scmp.eq.s32.totalorder %s21, 0
      %p298 = por %p296, %p297
      %p299 = scmp.ne.s32.totalorder %s288, %s291
      %p300 = scmp.eq.s32.totalorder %s26, 1
      %p301 = por %p299, %p300
      %p302 = scmp.ne.s32.totalorder %s291, %s292
      %p303 = scmp.eq.s32.totalorder %s26, 0
      %p304 = por %p302, %p303
      %p305 = scmp.ne.s32.totalorder %s291, %s292
      %p306 = scmp.eq.s32.totalorder %s27, 1
      %p307 = por %p305, %p306
      %p309 = scmp.ne.s32.totalorder %s292, %s308
      %p310 = scmp.eq.s32.totalorder %s27, 0
      %p311 = por %p309, %p310
      %p312 = scmp.le.s32.totalorder 1, %s21
      %p313 = scmp.lt.s32.totalorder %s21, 3
      %p314 = pnand %p312, %p313
      %p315 = pneg %p314
      // Predicated region
      $region9: #{tpu_custom_call.1} parent=5 // pred_check
        _
      $region10: #{tpu_custom_call.1} parent=5 // pred_check_branch
        %317 = sbr.rel (%p314) target = $region12
      $region11: #{tpu_custom_call.1} parent=5 // pred_region
        %s318 = ssub.s32 %s21, 1
        // Predicated region
        $region13: #{tpu_custom_call.1} parent=11 // pred_check
          %p319 = pneg %p68
        $region14: #{tpu_custom_call.1} parent=11 // pred_check_branch
          %321 = sbr.rel (%p319) target = $region16
        $region15: #{tpu_custom_call.1} parent=11 // pred_region
          _
        $region16: #{tpu_custom_call.1} parent=11 // pred_fallthru
          _
        // Predicated region
        $region17: #{tpu_custom_call.1} parent=11 // pred_check
          %p322 = pneg %p89
        $region18: #{tpu_custom_call.1} parent=11 // pred_check_branch
          %324 = sbr.rel (%p322) target = $region20
        $region19: #{tpu_custom_call.1} parent=11 // pred_region
          _
        $region20: #{tpu_custom_call.1} parent=11 // pred_fallthru
          _
        // Predicated region
        $region21: #{tpu_custom_call.1} parent=11 // pred_check
          %p325 = pneg %p110
        $region22: #{tpu_custom_call.1} parent=11 // pred_check_branch
          %327 = sbr.rel (%p325) target = $region24
        $region23: #{tpu_custom_call.1} parent=11 // pred_region
          _
        $region24: #{tpu_custom_call.1} parent=11 // pred_fallthru
          _
        // Predicated region
        $region25: #{tpu_custom_call.1} parent=11 // pred_check
          %p328 = pneg %p131
        $region26: #{tpu_custom_call.1} parent=11 // pred_check_branch
          %330 = sbr.rel (%p328) target = $region28
        $region27: #{tpu_custom_call.1} parent=11 // pred_region
          _
        $region28: #{tpu_custom_call.1} parent=11 // pred_fallthru
          _
        // Predicated region
        $region29: #{tpu_custom_call.1} parent=11 // pred_check
          %p331 = pneg %p152
        $region30: #{tpu_custom_call.1} parent=11 // pred_check_branch
          %333 = sbr.rel (%p331) target = $region32
        $region31: #{tpu_custom_call.1} parent=11 // pred_region
          _
        $region32: #{tpu_custom_call.1} parent=11 // pred_fallthru
          _
        // Predicated region
        $region33: #{tpu_custom_call.1} parent=11 // pred_check
          %p334 = pneg %p173
        $region34: #{tpu_custom_call.1} parent=11 // pred_check_branch
          %336 = sbr.rel (%p334) target = $region36
        $region35: #{tpu_custom_call.1} parent=11 // pred_region
          _
        $region36: #{tpu_custom_call.1} parent=11 // pred_fallthru
          _
        // Predicated region
        $region37: #{tpu_custom_call.1} parent=11 // pred_check
          %p337 = pneg %p194
        $region38: #{tpu_custom_call.1} parent=11 // pred_check_branch
          %339 = sbr.rel (%p337) target = $region40
        $region39: #{tpu_custom_call.1} parent=11 // pred_region
          _
        $region40: #{tpu_custom_call.1} parent=11 // pred_fallthru
          _
        // Predicated region
        $region41: #{tpu_custom_call.1} parent=11 // pred_check
          %p340 = pneg %p215
        $region42: #{tpu_custom_call.1} parent=11 // pred_check_branch
          %342 = sbr.rel (%p340) target = $region44
        $region43: #{tpu_custom_call.1} parent=11 // pred_region
          _
        $region44: #{tpu_custom_call.1} parent=11 // pred_fallthru
          _
        // Predicated region
        $region45: #{tpu_custom_call.1} parent=11 // pred_check
          %p343 = pneg %p236
        $region46: #{tpu_custom_call.1} parent=11 // pred_check_branch
          %345 = sbr.rel (%p343) target = $region48
        $region47: #{tpu_custom_call.1} parent=11 // pred_region
          _
        $region48: #{tpu_custom_call.1} parent=11 // pred_fallthru
          _
        // Predicated region
        $region49: #{tpu_custom_call.1} parent=11 // pred_check
          %p346 = pneg %p257
        $region50: #{tpu_custom_call.1} parent=11 // pred_check_branch
          %348 = sbr.rel (%p346) target = $region52
        $region51: #{tpu_custom_call.1} parent=11 // pred_region
          _
        $region52: #{tpu_custom_call.1} parent=11 // pred_fallthru
          _
        // Predicated region
        $region53: #{tpu_custom_call.1} parent=11 // pred_check
          %p349 = pneg %p278
        $region54: #{tpu_custom_call.1} parent=11 // pred_check_branch
          %351 = sbr.rel (%p349) target = $region56
        $region55: #{tpu_custom_call.1} parent=11 // pred_region
          _
        $region56: #{tpu_custom_call.1} parent=11 // pred_fallthru
          _
      $region12: #{tpu_custom_call.1} parent=5 // pred_fallthru
        _
      %p352 = scmp.lt.s32.totalorder %s21, 2
      // Predicated region
      $region57: #{tpu_custom_call.1} parent=5 // pred_check
        %p353 = pneg %p352
      $region58: #{tpu_custom_call.1} parent=5 // pred_check_branch
        %355 = sbr.rel (%p353) target = $region60
      $region59: #{tpu_custom_call.1} parent=5 // pred_region
        // Predicated region
        $region61: #{tpu_custom_call.1} parent=59 // pred_check
          %p356 = pneg %p41
        $region62: #{tpu_custom_call.1} parent=59 // pred_check_branch
          %358 = sbr.rel (%p356) target = $region64
        $region63: #{tpu_custom_call.1} parent=59 // pred_region
          %p359 = scmp.lt.s32.totalorder %s21, 1
          %s360 = scalar_select %p359, %s21, 1
          %s361 = smul.addr %s360, 8
          %s362 = scalar_lea.vmem %s0, %s361
        $region64: #{tpu_custom_call.1} parent=59 // pred_fallthru
          _
      $region60: #{tpu_custom_call.1} parent=5 // pred_fallthru
        _
      %p363 = scmp.le.s32.totalorder 1, %s21
      %p364 = scmp.lt.s32.totalorder %s21, 3
      %p365 = pnand %p363, %p364
      %p366 = pneg %p365
      // Predicated region
      $region65: #{tpu_custom_call.1} parent=5 // pred_check
        _
      $region66: #{tpu_custom_call.1} parent=5 // pred_check_branch
        %368 = sbr.rel (%p365) target = $region68
      $region67: #{tpu_custom_call.1} parent=5 // pred_region
        %s369 = ssub.s32 %s21, 1
        %p370 = scmp.lt.s32.totalorder %s26, 1
        %s371 = scalar_select %p370, %s26, 1
        %s372 = smul.addr %s371, 8
        %s373 = scalar_lea.vmem %s0, %s372
        %p374 = pneg %p47
        %p375 = pneg %p44
        %p376 = pneg %p68
        %p377 = pneg %p65
        %p378 = pneg %p89
        %p379 = pneg %p86
        %p380 = pneg %p110
        %p381 = pneg %p107
        %p382 = pneg %p131
        %p383 = pneg %p128
        %p384 = pneg %p152
        %p385 = pneg %p149
        %p386 = pneg %p173
        %p387 = pneg %p170
        %p388 = pneg %p194
        %p389 = pneg %p191
        %p390 = pneg %p215
        %p391 = pneg %p212
        %p392 = pneg %p236
        %p393 = pneg %p233
        %p394 = pneg %p257
        %p395 = pneg %p254
        %p396 = pneg %p278
        %p397 = pneg %p275
        %p398 = pneg %p304
        %p399 = pneg %p301
        %s400 = sand.u32 %s291, 1
        %s401 = scalar_lea.sflag [#allocation3], %s400
        %s402 = sand.u32 %s291, 1
        %s403 = smul.addr %s402, 8
        %s404 = scalar_lea.vmem [#allocation2], %s403
        %p405 = scmp.lt.s32.totalorder %s26, 1
        %s406 = scalar_select %p405, %s26, 1
        %s407 = smul.addr %s406, 8
        %s408 = scalar_lea.vmem %s0, %s407
        %v410 = vld [vmem:[%s408] sm:$0xff]
        %v411 = vld [vmem:[%s1] sm:$0x1]
        %v412 = vld [vmem:[%s2] sm:$0x1]
        %vm413 = vcmask 261120
        %v414 = vsel %vm413, %v410, 0.0
        %415 = vadd.xlane.f32.xlu0 %v414
        %v416 = vpop.xlane.xlu0 %415
        %v417 = vrcp.pop 32.0
        %v418 = vmul.f32 32.0, %v417
        %v419 = vsub.f32 1.0, %v418
        %v420 = vmul.f32 %v417, %v419
        %v421 = vadd.f32 %v417, %v420
        %vm422 = vweird.f32 %v417
        %v423 = vsel %vm422, %v417, %v421
        %v424 = vmul.f32 %v416, %v423
        %v425 = vsub.f32 %v410, %v424
        %v426 = vmul.f32 %v425, %v425
        %v427 = vsel %vm413, %v426, 0.0
        %428 = vadd.xlane.f32.xlu0 %v427
        %v429 = vpop.xlane.xlu0 %428
        %v430 = vmul.f32 %v429, %v423
        %v431 = vadd.f32 %v430, 1e-05
        %v432 = vrsqrt.pop %v431
        %v433 = vmul.f32 %v432, %v431
        %v434 = vmul.f32 %v433, %v432
        %v435 = vmul.f32 0.5, %v434
        %v436 = vsub.f32 1.5, %v435
        %v437 = vmul.f32 %v432, %v436
        %vm438 = vweird.f32 %v431
        %vm439 = vweird.f32 %v432
        %vm440 = vmor %vm438, %vm439
        %v441 = vsel %vm440, %v432, %v437
        %v442 = vmul.f32 %v425, %v441
        %v444 = vperm.slane %v411, 0
        %v446 = vmul.f32 %v442, %v444
        %v448 = vperm.slane %v412, 0
        %v450 = vadd.f32 %v446, %v448
        %v451 = vpack.c.bf16 %v450, %v450
        %v452 = vld [vmem:[%s3] sm:$0xf]
        %v453 = vld [vmem:[%s3 + $0x4] sm:$0xf]
        %v454 = vld [vmem:[%s3 + $0x8] sm:$0xf]
        %v455 = vld [vmem:[%s3 + $0xc] sm:$0xf]
        %v460 = vunpack.c.l.b16 %v452
        %v461 = vunpack.c.l.b16 %v453
        %v462 = vunpack.c.l.b16 %v454
        %v463 = vunpack.c.l.b16 %v455
        %v464 = vpack.c.b16 %v461, %v460
        %v465 = vpack.c.b16 %v463, %v462
        %v469 = vsel %vm413, %v451, 0
        %471 = vmatpush.bf16.msra.mxu0 0
        %472 = vmatpush.bf16.msra.mxu0 0
        %473 = vmatpush.bf16.msra.mxu0 0
        %474 = vmatpush.bf16.msra.mxu0 0
        %475 = vmatpush.bf16.msra.mxu0 0
        %476 = vmatpush.bf16.msra.mxu0 0
        %477 = vmatpush.bf16.msra.mxu0 %v465
        %478 = vmatpush.bf16.msra.mxu0 %v464
        %479 = vmatmul.bf16.gmra.mxu0 %v469
        %v480 = vpop.f32.mrf.mxu0
        %v481 = vadd.f32 0.0, %v480
        %v482 = vpop.f32.mrf.mxu0
        %483 = vdwg.mxu0
        %v484 = vlaneseq
        %v485 = vshrl.u32 %v484, 7
        %v486 = vlaneseq
        %v487 = vand.u32 %v486, 127
        %vm488 = vcmp.ge.s32.totalorder %v485, %v487
        %v489 = vsel %vm488, 0.0, -1e+30
        %491 = vrot.lane.b32.xlu0 %v481, 120
        %v492 = vpop.permute.xlu0 %491
        %493 = vrot.lane.b32.xlu0 %v481, 112
        %v494 = vpop.permute.xlu0 %493
        %495 = vrot.lane.b32.xlu0 %v481, 104
        %v496 = vpop.permute.xlu0 %495
        %497 = vrot.lane.b32.xlu0 %v481, 96
        %v498 = vpop.permute.xlu0 %497
        %vm499 = vcmask 64512
        %v500 = vsel %vm499, %v481, 0
        %v502 = vsel %vm499, %v498, 0
        %504 = vmatpush.xpose.msra.mxu0 0.0
        %505 = vmatpush.xpose.msra.mxu0 0.0
        %506 = vmatpush.xpose.msra.mxu0 0.0
        %507 = vmatpush.xpose.msra.mxu0 0.0
        %508 = vmatpush.xpose.msra.mxu0 0.0
        %509 = vmatpush.xpose.msra.mxu0 0.0
        %510 = vmatpush.xpose.msra.mxu0 0.0
        %511 = vmatpush.xpose.msra.mxu0 0.0
        %512 = vmatpush.xpose.msra.mxu0 0.0
        %513 = vmatpush.xpose.msra.mxu0 0.0
        %514 = vmatpush.xpose.msra.mxu0 0.0
        %515 = vmatpush.xpose.msra.mxu0 0.0
        %516 = vmatpush.xpose.msra.mxu0 0.0
        %517 = vmatpush.xpose.msra.mxu0 0.0
        %518 = vmatpush.xpose.msra.mxu0 0.0
        %519 = vmatpush.xpose.msra.mxu0 %v502
        %520 = vmatmul.f32.gmra.mxu0 %v500
        %v521 = vpop.f32.mrf.mxu0
        %v522 = vadd.f32 0.0, %v521
        %523 = vdwg.mxu0
        %524 = vrot.lane.b32.xlu0 %v492, 96
        %v525 = vpop.permute.xlu0 %524
        %v526 = vsel %vm499, %v492, 0
        %v528 = vsel %vm499, %v525, 0
        %530 = vmatpush.xpose.msra.mxu0 0.0
        %531 = vmatpush.xpose.msra.mxu0 0.0
        %532 = vmatpush.xpose.msra.mxu0 0.0
        %533 = vmatpush.xpose.msra.mxu0 0.0
        %534 = vmatpush.xpose.msra.mxu0 0.0
        %535 = vmatpush.xpose.msra.mxu0 0.0
        %536 = vmatpush.xpose.msra.mxu0 0.0
        %537 = vmatpush.xpose.msra.mxu0 0.0
        %538 = vmatpush.xpose.msra.mxu0 0.0
        %539 = vmatpush.xpose.msra.mxu0 0.0
        %540 = vmatpush.xpose.msra.mxu0 0.0
        %541 = vmatpush.xpose.msra.mxu0 0.0
        %542 = vmatpush.xpose.msra.mxu0 0.0
        %543 = vmatpush.xpose.msra.mxu0 0.0
        %544 = vmatpush.xpose.msra.mxu0 0.0
        %545 = vmatpush.xpose.msra.mxu0 %v528
        %546 = vmatmul.f32.gmra.mxu0 %v526
        %v547 = vpop.f32.mrf.mxu0
        %v548 = vadd.f32 0.0, %v547
        %549 = vdwg.mxu0
        %550 = vrot.lane.b32.xlu0 %v494, 96
        %v551 = vpop.permute.xlu0 %550
        %v552 = vsel %vm499, %v494, 0
        %v554 = vsel %vm499, %v551, 0
        %556 = vmatpush.xpose.msra.mxu0 0.0
        %557 = vmatpush.xpose.msra.mxu0 0.0
        %558 = vmatpush.xpose.msra.mxu0 0.0
        %559 = vmatpush.xpose.msra.mxu0 0.0
        %560 = vmatpush.xpose.msra.mxu0 0.0
        %561 = vmatpush.xpose.msra.mxu0 0.0
        %562 = vmatpush.xpose.msra.mxu0 0.0
        %563 = vmatpush.xpose.msra.mxu0 0.0
        %564 = vmatpush.xpose.msra.mxu0 0.0
        %565 = vmatpush.xpose.msra.mxu0 0.0
        %566 = vmatpush.xpose.msra.mxu0 0.0
        %567 = vmatpush.xpose.msra.mxu0 0.0
        %568 = vmatpush.xpose.msra.mxu0 0.0
        %569 = vmatpush.xpose.msra.mxu0 0.0
        %570 = vmatpush.xpose.msra.mxu0 0.0
        %571 = vmatpush.xpose.msra.mxu0 %v554
        %572 = vmatmul.f32.gmra.mxu0 %v552
        %v573 = vpop.f32.mrf.mxu0
        %v574 = vadd.f32 0.0, %v573
        %575 = vdwg.mxu0
        %576 = vrot.lane.b32.xlu0 %v496, 96
        %v577 = vpop.permute.xlu0 %576
        %v578 = vsel %vm499, %v496, 0
        %v580 = vsel %vm499, %v577, 0
        %582 = vmatpush.xpose.msra.mxu0 0.0
        %583 = vmatpush.xpose.msra.mxu0 0.0
        %584 = vmatpush.xpose.msra.mxu0 0.0
        %585 = vmatpush.xpose.msra.mxu0 0.0
        %586 = vmatpush.xpose.msra.mxu0 0.0
        %587 = vmatpush.xpose.msra.mxu0 0.0
        %588 = vmatpush.xpose.msra.mxu0 0.0
        %589 = vmatpush.xpose.msra.mxu0 0.0
        %590 = vmatpush.xpose.msra.mxu0 0.0
        %591 = vmatpush.xpose.msra.mxu0 0.0
        %592 = vmatpush.xpose.msra.mxu0 0.0
        %593 = vmatpush.xpose.msra.mxu0 0.0
        %594 = vmatpush.xpose.msra.mxu0 0.0
        %595 = vmatpush.xpose.msra.mxu0 0.0
        %596 = vmatpush.xpose.msra.mxu0 0.0
        %597 = vmatpush.xpose.msra.mxu0 %v580
        %598 = vmatmul.f32.gmra.mxu0 %v578
        %v599 = vpop.f32.mrf.mxu0
        %v600 = vadd.f32 0.0, %v599
        %601 = vdwg.mxu0
        %v602 = vmul.f32 %v522, 0.17677669
        %v603 = vmul.f32 %v548, 0.17677669
        %v604 = vmul.f32 %v574, 0.17677669
        %v605 = vmul.f32 %v600, 0.17677669
        %v606 = vadd.f32 %v602, %v489
        %v607 = vadd.f32 %v603, %v489
        %v608 = vadd.f32 %v604, %v489
        %v609 = vadd.f32 %v605, %v489
        %v610 = vsel %vm499, %v606, -inf
        %611 = vmax.xlane.f32.xlu0 %v610
        %v612 = vpop.xlane.xlu0 %611
        %v613 = vsel %vm499, %v607, -inf
        %614 = vmax.xlane.f32.xlu0 %v613
        %v615 = vpop.xlane.xlu0 %614
        %v616 = vsel %vm499, %v608, -inf
        %617 = vmax.xlane.f32.xlu0 %v616
        %v618 = vpop.xlane.xlu0 %617
        %v619 = vsel %vm499, %v609, -inf
        %620 = vmax.xlane.f32.xlu0 %v619
        %v621 = vpop.xlane.xlu0 %620
        %v622 = vsub.f32 %v606, %v612
        %v623 = vsub.f32 %v607, %v615
        %v624 = vsub.f32 %v608, %v618
        %v625 = vsub.f32 %v609, %v621
        %v626 = vmul.f32 %v622, 1.442695
        %v627 = vpow.pop %v626
        %v628 = vmul.f32 %v623, 1.442695
        %v629 = vpow.pop %v628
        %v630 = vmul.f32 %v624, 1.442695
        %v631 = vpow.pop %v630
        %v632 = vmul.f32 %v625, 1.442695
        %v633 = vpow.pop %v632
        %v634 = vsel %vm499, %v627, 0.0
        %635 = vadd.xlane.f32.xlu0 %v634
        %v636 = vpop.xlane.xlu0 %635
        %v637 = vsel %vm499, %v629, 0.0
        %638 = vadd.xlane.f32.xlu0 %v637
        %v639 = vpop.xlane.xlu0 %638
        %v640 = vsel %vm499, %v631, 0.0
        %641 = vadd.xlane.f32.xlu0 %v640
        %v642 = vpop.xlane.xlu0 %641
        %v643 = vsel %vm499, %v633, 0.0
        %644 = vadd.xlane.f32.xlu0 %v643
        %v645 = vpop.xlane.xlu0 %644
        %646 = vrot.lane.b32.xlu0 %v481, 64
        %v647 = vpop.permute.xlu0 %646
        %v650 = vsel %vm499, %v627, 0
        %652 = vmatpush.msra.mxu0 0.0
        %653 = vmatpush.msra.mxu0 0.0
        %654 = vmatpush.msra.mxu0 0.0
        %655 = vmatpush.msra.mxu0 0.0
        %656 = vmatpush.msra.mxu0 0.0
        %657 = vmatpush.msra.mxu0 0.0
        %658 = vmatpush.msra.mxu0 0.0
        %659 = vmatpush.msra.mxu0 0.0
        %660 = vmatpush.msra.mxu0 0.0
        %661 = vmatpush.msra.mxu0 0.0
        %662 = vmatpush.msra.mxu0 0.0
        %663 = vmatpush.msra.mxu0 0.0
        %664 = vmatpush.msra.mxu0 0.0
        %665 = vmatpush.msra.mxu0 0.0
        %666 = vmatpush.msra.mxu0 0.0
        %667 = vmatpush.msra.mxu0 %v647
        %668 = vmatmul.f32.gmra.mxu0 %v650
        %v669 = vpop.f32.mrf.mxu0
        %v670 = vadd.f32 0.0, %v669
        %671 = vdwg.mxu0
        %672 = vrot.lane.b32.xlu0 %v492, 64
        %v673 = vpop.permute.xlu0 %672
        %v676 = vsel %vm499, %v629, 0
        %678 = vmatpush.msra.mxu0 0.0
        %679 = vmatpush.msra.mxu0 0.0
        %680 = vmatpush.msra.mxu0 0.0
        %681 = vmatpush.msra.mxu0 0.0
        %682 = vmatpush.msra.mxu0 0.0
        %683 = vmatpush.msra.mxu0 0.0
        %684 = vmatpush.msra.mxu0 0.0
        %685 = vmatpush.msra.mxu0 0.0
        %686 = vmatpush.msra.mxu0 0.0
        %687 = vmatpush.msra.mxu0 0.0
        %688 = vmatpush.msra.mxu0 0.0
        %689 = vmatpush.msra.mxu0 0.0
        %690 = vmatpush.msra.mxu0 0.0
        %691 = vmatpush.msra.mxu0 0.0
        %692 = vmatpush.msra.mxu0 0.0
        %693 = vmatpush.msra.mxu0 %v673
        %694 = vmatmul.f32.gmra.mxu0 %v676
        %v695 = vpop.f32.mrf.mxu0
        %v696 = vadd.f32 0.0, %v695
        %697 = vdwg.mxu0
        %698 = vrot.lane.b32.xlu0 %v494, 64
        %v699 = vpop.permute.xlu0 %698
        %v702 = vsel %vm499, %v631, 0
        %704 = vmatpush.msra.mxu0 0.0
        %705 = vmatpush.msra.mxu0 0.0
        %706 = vmatpush.msra.mxu0 0.0
        %707 = vmatpush.msra.mxu0 0.0
        %708 = vmatpush.msra.mxu0 0.0
        %709 = vmatpush.msra.mxu0 0.0
        %710 = vmatpush.msra.mxu0 0.0
        %711 = vmatpush.msra.mxu0 0.0
        %712 = vmatpush.msra.mxu0 0.0
        %713 = vmatpush.msra.mxu0 0.0
        %714 = vmatpush.msra.mxu0 0.0
        %715 = vmatpush.msra.mxu0 0.0
        %716 = vmatpush.msra.mxu0 0.0
        %717 = vmatpush.msra.mxu0 0.0
        %718 = vmatpush.msra.mxu0 0.0
        %719 = vmatpush.msra.mxu0 %v699
        %720 = vmatmul.f32.gmra.mxu0 %v702
        %v721 = vpop.f32.mrf.mxu0
        %v722 = vadd.f32 0.0, %v721
        %723 = vdwg.mxu0
        %724 = vrot.lane.b32.xlu0 %v496, 64
        %v725 = vpop.permute.xlu0 %724
        %v728 = vsel %vm499, %v633, 0
        %730 = vmatpush.msra.mxu0 0.0
        %731 = vmatpush.msra.mxu0 0.0
        %732 = vmatpush.msra.mxu0 0.0
        %733 = vmatpush.msra.mxu0 0.0
        %734 = vmatpush.msra.mxu0 0.0
        %735 = vmatpush.msra.mxu0 0.0
        %736 = vmatpush.msra.mxu0 0.0
        %737 = vmatpush.msra.mxu0 0.0
        %738 = vmatpush.msra.mxu0 0.0
        %739 = vmatpush.msra.mxu0 0.0
        %740 = vmatpush.msra.mxu0 0.0
        %741 = vmatpush.msra.mxu0 0.0
        %742 = vmatpush.msra.mxu0 0.0
        %743 = vmatpush.msra.mxu0 0.0
        %744 = vmatpush.msra.mxu0 0.0
        %745 = vmatpush.msra.mxu0 %v725
        %746 = vmatmul.f32.gmra.mxu0 %v728
        %v747 = vpop.f32.mrf.mxu0
        %v748 = vadd.f32 0.0, %v747
        %749 = vdwg.mxu0
        %v750 = vrcp.pop %v636
        %v751 = vrcp.pop %v639
        %v752 = vrcp.pop %v642
        %v753 = vrcp.pop %v645
        %v754 = vmul.f32 %v670, %v750
        %v755 = vmul.f32 %v696, %v751
        %v756 = vmul.f32 %v722, %v752
        %v757 = vmul.f32 %v748, %v753
        %759 = vrot.lane.b32.xlu0 %v755, 8
        %v760 = vpop.permute.xlu0 %759
        %763 = vrot.lane.b32.xlu0 %v756, 16
        %v764 = vpop.permute.xlu0 %763
        %767 = vrot.lane.b32.xlu0 %v757, 24
        %v768 = vpop.permute.xlu0 %767
        %v770 = vsel %vm499, %v754, %v760
        %vm771 = vcmask 130048
        %v772 = vsel %vm771, %v770, %v764
        %vm773 = vcmask 195584
        %v774 = vsel %vm773, %v772, %v768
        %v775 = vpack.c.bf16 %v774, %v774
        %v776 = vld [vmem:[%s4] sm:$0xf]
        %v777 = vld [vmem:[%s4 + $0x4] sm:$0xf]
        %v778 = vld [vmem:[%s4 + $0x8] sm:$0xf]
        %v779 = vld [vmem:[%s4 + $0xc] sm:$0xf]
        %v780 = vld [vmem:[%s5] sm:$0x1]
        %v782 = vperm.slane %v780, 0
        %v788 = vunpack.c.l.b16 %v776
        %v789 = vunpack.c.l.b16 %v777
        %v790 = vunpack.c.l.b16 %v778
        %v791 = vunpack.c.l.b16 %v779
        %v792 = vpack.c.b16 %v789, %v788
        %v793 = vpack.c.b16 %v791, %v790
        %v797 = vsel %vm413, %v775, 0
        %799 = vmatpush.bf16.msra.mxu0 0
        %800 = vmatpush.bf16.msra.mxu0 0
        %801 = vmatpush.bf16.msra.mxu0 0
        %802 = vmatpush.bf16.msra.mxu0 0
        %803 = vmatpush.bf16.msra.mxu0 0
        %804 = vmatpush.bf16.msra.mxu0 0
        %805 = vmatpush.bf16.msra.mxu0 %v793
        %806 = vmatpush.bf16.msra.mxu0 %v792
        %807 = vmatmul.bf16.gmra.mxu0 %v797
        %v808 = vpop.f32.mrf.mxu0
        %v809 = vadd.f32 %v782, %v808
        %v810 = vpop.f32.mrf.mxu0
        %811 = vdwg.mxu0
        %v812 = vadd.f32 %v450, %v809
        %v813 = vld [vmem:[%s6] sm:$0x1]
        %v814 = vld [vmem:[%s7] sm:$0x1]
        %v815 = vsel %vm413, %v812, 0.0
        %816 = vadd.xlane.f32.xlu0 %v815
        %v817 = vpop.xlane.xlu0 %816
        %v818 = vmul.f32 %v817, %v423
        %v819 = vsub.f32 %v812, %v818
        %v820 = vmul.f32 %v819, %v819
        %v821 = vsel %vm413, %v820, 0.0
        %822 = vadd.xlane.f32.xlu0 %v821
        %v823 = vpop.xlane.xlu0 %822
        %v824 = vmul.f32 %v823, %v423
        %v825 = vadd.f32 %v824, 1e-05
        %v826 = vrsqrt.pop %v825
        %v827 = vmul.f32 %v826, %v825
        %v828 = vmul.f32 %v827, %v826
        %v829 = vmul.f32 0.5, %v828
        %v830 = vsub.f32 1.5, %v829
        %v831 = vmul.f32 %v826, %v830
        %vm832 = vweird.f32 %v825
        %vm833 = vweird.f32 %v826
        %vm834 = vmor %vm832, %vm833
        %v835 = vsel %vm834, %v826, %v831
        %v836 = vmul.f32 %v819, %v835
        %v838 = vperm.slane %v813, 0
        %v840 = vmul.f32 %v836, %v838
        %v842 = vperm.slane %v814, 0
        %v844 = vadd.f32 %v840, %v842
        %v845 = vpack.c.bf16 %v844, %v844
        %v846 = vld [vmem:[%s8] sm:$0xf]
        %v847 = vld [vmem:[%s8 + $0x4] sm:$0xf]
        %v848 = vld [vmem:[%s8 + $0x8] sm:$0xf]
        %v849 = vld [vmem:[%s8 + $0xc] sm:$0xf]
        %v850 = vld [vmem:[%s9] sm:$0x1]
        %v852 = vperm.slane %v850, 0
        %v858 = vunpack.c.l.b16 %v846
        %v859 = vunpack.c.l.b16 %v847
        %v860 = vunpack.c.l.b16 %v848
        %v861 = vunpack.c.l.b16 %v849
        %v862 = vpack.c.b16 %v859, %v858
        %v863 = vpack.c.b16 %v861, %v860
        %v867 = vsel %vm413, %v845, 0
        %869 = vmatpush.bf16.msra.mxu0 0
        %870 = vmatpush.bf16.msra.mxu0 0
        %871 = vmatpush.bf16.msra.mxu0 0
        %872 = vmatpush.bf16.msra.mxu0 0
        %873 = vmatpush.bf16.msra.mxu0 0
        %874 = vmatpush.bf16.msra.mxu0 0
        %875 = vmatpush.bf16.msra.mxu0 %v863
        %876 = vmatpush.bf16.msra.mxu0 %v862
        %877 = vmatmul.bf16.gmra.mxu0 %v867
        %v878 = vpop.f32.mrf.mxu0
        %v879 = vadd.f32 %v852, %v878
        %v880 = vpop.f32.mrf.mxu0
        %881 = vdwg.mxu0
        %v882 = vmax.f32 %v879, 0.0
        %v883 = vpack.c.bf16 %v882, %v882
        %v884 = vld [vmem:[%s10] sm:$0xf]
        %v885 = vld [vmem:[%s10 + $0x4] sm:$0xf]
        %v886 = vld [vmem:[%s10 + $0x8] sm:$0xf]
        %v887 = vld [vmem:[%s10 + $0xc] sm:$0xf]
        %v888 = vld [vmem:[%s10 + $0x10] sm:$0xf]
        %v889 = vld [vmem:[%s10 + $0x14] sm:$0xf]
        %v890 = vld [vmem:[%s10 + $0x18] sm:$0xf]
        %v891 = vld [vmem:[%s10 + $0x1c] sm:$0xf]
        %v892 = vld [vmem:[%s10 + $0x20] sm:$0xf]
        %v893 = vld [vmem:[%s10 + $0x24] sm:$0xf]
        %v894 = vld [vmem:[%s10 + $0x28] sm:$0xf]
        %v895 = vld [vmem:[%s10 + $0x2c] sm:$0xf]
        %v896 = vld [vmem:[%s10 + $0x30] sm:$0xf]
        %v897 = vld [vmem:[%s10 + $0x34] sm:$0xf]
        %v898 = vld [vmem:[%s10 + $0x38] sm:$0xf]
        %v899 = vld [vmem:[%s10 + $0x3c] sm:$0xf]
        %v900 = vld [vmem:[%s11] sm:$0x1]
        %v902 = vperm.slane %v900, 0
        %v920 = vunpack.c.l.b16 %v884
        %v921 = vunpack.c.l.b16 %v885
        %v922 = vunpack.c.l.b16 %v886
        %v923 = vunpack.c.l.b16 %v887
        %v924 = vunpack.c.l.b16 %v888
        %v925 = vunpack.c.l.b16 %v889
        %v926 = vunpack.c.l.b16 %v890
        %v927 = vunpack.c.l.b16 %v891
        %v928 = vunpack.c.l.b16 %v892
        %v929 = vunpack.c.l.b16 %v893
        %v930 = vunpack.c.l.b16 %v894
        %v931 = vunpack.c.l.b16 %v895
        %v932 = vunpack.c.l.b16 %v896
        %v933 = vunpack.c.l.b16 %v897
        %v934 = vunpack.c.l.b16 %v898
        %v935 = vunpack.c.l.b16 %v899
        %v936 = vpack.c.b16 %v921, %v920
        %v937 = vpack.c.b16 %v923, %v922
        %v938 = vpack.c.b16 %v925, %v924
        %v939 = vpack.c.b16 %v927, %v926
        %v940 = vpack.c.b16 %v929, %v928
        %v941 = vpack.c.b16 %v931, %v930
        %v942 = vpack.c.b16 %v933, %v932
        %v943 = vpack.c.b16 %v935, %v934
        %952 = vmatpush.bf16.msra.mxu0 %v943
        %953 = vmatpush.bf16.msra.mxu0 %v942
        %954 = vmatpush.bf16.msra.mxu0 %v941
        %955 = vmatpush.bf16.msra.mxu0 %v940
        %956 = vmatpush.bf16.msra.mxu0 %v939
        %957 = vmatpush.bf16.msra.mxu0 %v938
        %958 = vmatpush.bf16.msra.mxu0 %v937
        %959 = vmatpush.bf16.msra.mxu0 %v936
        %960 = vmatmul.bf16.gmra.mxu0 %v883
        %v961 = vpop.f32.mrf.mxu0
        %v962 = vadd.f32 %v902, %v961
        %v963 = vpop.f32.mrf.mxu0
        %964 = vdwg.mxu0
        %v965 = vadd.f32 %v844, %v962
        %966 = vst.msk [vmem:[%s404] sm:$0xff] %vm413, %v965
        %s967 = sand.u32 %s291, 1
        %s968 = scalar_lea.sflag [#allocation3], %s967
        %s969 = sand.u32 %s291, 1
        %s970 = smul.addr %s969, 8
        %s971 = scalar_lea.vmem [#allocation2], %s970
        // Predicated region
        $region69: #{tpu_custom_call.1} parent=67 // pred_check
          %p972 = pneg %p301
        $region70: #{tpu_custom_call.1} parent=67 // pred_check_branch
          %974 = sbr.rel (%p972) target = $region72
        $region71: #{tpu_custom_call.1} parent=67 // pred_region
          %976 = vsyncadd %s968, 0
          %s977 = smul.addr %s26, 8
          %s978 = scalar_lea.hbm %s12, %s977
          %s980 = sshll.u32 %s971, 4
          %s981 = int_to_ptr.vmem [resolvable:$true] %s980
          %s982 = sshll.u32 %s978, 4
          %s983 = int_to_ptr.hbm [resolvable:$true] %s982
          %985 = dma.vmem_to_hbm [thread:$0]  %s981, 128, %s983, %s968
        $region72: #{tpu_custom_call.1} parent=67 // pred_fallthru
          _
      $region68: #{tpu_custom_call.1} parent=5 // pred_fallthru
        _
      %p986 = scmp.le.s32.totalorder 2, %s21
      // Predicated region
      $region73: #{tpu_custom_call.1} parent=5 // pred_check
        %p987 = pneg %p986
      $region74: #{tpu_custom_call.1} parent=5 // pred_check_branch
        %989 = sbr.rel (%p987) target = $region76
      $region75: #{tpu_custom_call.1} parent=5 // pred_region
        %s990 = ssub.s32 %s21, 2
        // Predicated region
        $region77: #{tpu_custom_call.1} parent=75 // pred_check
          %p991 = pneg %p307
        $region78: #{tpu_custom_call.1} parent=75 // pred_check_branch
          %993 = sbr.rel (%p991) target = $region80
        $region79: #{tpu_custom_call.1} parent=75 // pred_region
          %s994 = sand.u32 %s292, 1
          %s995 = scalar_lea.sflag [#allocation3], %s994
          %s996 = sand.u32 %s292, 1
          %s997 = smul.addr %s996, 8
          %s998 = scalar_lea.vmem [#allocation2], %s997
          %1000 = dma.done %s995, 128
        $region80: #{tpu_custom_call.1} parent=75 // pred_fallthru
          _
      $region76: #{tpu_custom_call.1} parent=5 // pred_fallthru
        _
    $region6: #{tpu_custom_call.1} parent=1 // loop_footer
      %s25 = sadd.s32 1, %s21
    $region7: #{tpu_custom_call.1} parent=1 // loop_footer_branch
      %20 = sbr.rel target = $region3
    $region8: #{tpu_custom_call.1} parent=1 // loop_exit
      _
    %1001 = vsyncpa [#allocation3], 1
    %s1002 = scalar_lea.sflag [#allocation3], 1
    %1003 = vsyncpa %s1002, 1

</llo_original>
